<compile_context>
chip_gen: v5e
topology: v5e:2x2
jax: 0.10.0
libtpu: 0.0.40
codegen_flags: <defaults>
</compile_context>

<pallas_src>
import functools

import jax
import jax.numpy as jnp
from jax.experimental import pallas as pl
from jax.experimental.pallas import tpu as pltpu

_GN_EPS = 1e-5
_LANE = 128


def _round_up(x, m):
    return (x + m - 1) // m * m


def _vmem_cap_bytes():
    """Per-chip VMEM budget for vmem_limit_bytes (leave headroom below physical)."""
    try:
        phys = pltpu.get_tpu_info().vmem_capacity_bytes
    except Exception:  # conservative fallback if the query is unavailable
        phys = 64 * 2**20
    return int(min(max(phys - 16 * 2**20, 32 * 2**20), 96 * 2**20))


def _pick_nb(n, p, m_max=2048):
    """Batch samples folded into one grid step's matmul M dimension.

    Keeps M = nb*p <= m_max, prefers M a multiple of 256 (full MXU rows on
    v6e/v7x, also a multiple of 128 for v5e) and always leaves >= 2 grid steps
    when n > 1 so both v7x TensorCores get work on the "parallel" batch axis.
    """
    if n <= 1:
        return 1
    cap = max(n // 2, 1)
    best, best_aligned = 1, 0
    for d in range(1, cap + 1):
        if d * p > m_max:
            break
        best = d
        if (d * p) % 256 == 0:
            best_aligned = d
    return best_aligned or best


# -----------------------------------------------------------------------------
# Fused kernel: one (M, 9*Cin) @ (9*Cin, Cblk) bf16 MXU matmul (3x3 stride-2
# conv over the wrapper-side im2col) -> GroupNorm(num_groups=1) -> optional
# SiLU.  No scratch accumulator: the dot result feeds GN directly.
#
# x_ref : (nb, P, 9*Cin) bf16   im2col'd conv input for nb batch samples
# w_ref : (9*Cin, Cblk)  bf16   tap-major weights, zero-padded output lanes
# g_ref : (1, 1, Cblk)   f32    GN gamma (0 in padded lanes)
# b_ref : (1, 1, Cblk)   f32    GN beta  (0 in padded lanes)
# o_ref : (nb, P, Cblk)
# -----------------------------------------------------------------------------
def _conv_gn_act_kernel(x_ref, w_ref, g_ref, b_ref, o_ref, *,
                        c_true, apply_silu, eps):
    nb, p, k = x_ref.shape
    c_blk = w_ref.shape[-1]

    # Single fused-K matmul: all 9 conv taps contracted at once.
    lhs = x_ref[...].reshape(nb * p, k)
    y = jnp.dot(lhs, w_ref[...], preferred_element_type=jnp.float32)
    y = y.reshape(nb, p, c_blk)

    # GroupNorm(num_groups=1): per-sample statistics over (H*W, C_true),
    # two-pass (mean, then centered sum of squares).  Padded output lanes are
    # exact zeros (zero weight columns) so they do not perturb the plain sum;
    # mask them out of the centered residual.
    cnt = float(p * c_true)
    mean = jnp.sum(y, axis=(1, 2), keepdims=True) / cnt          # (nb, 1, 1)
    d = y - mean
    if c_blk != c_true:
        lane = jax.lax.broadcasted_iota(jnp.int32, (1, 1, c_blk), 2)
        d = jnp.where(lane < c_true, d, 0.0)
    var = jnp.sum(d * d, axis=(1, 2), keepdims=True) / cnt
    yn = d * jax.lax.rsqrt(var + eps)
    yn = yn * g_ref[...] + b_ref[...]                            # pad lanes -> 0
    if apply_silu:
        yn = yn * jax.nn.sigmoid(yn)
    o_ref[...] = yn.astype(o_ref.dtype)


# -----------------------------------------------------------------------------
# Wrapper glue (plain XLA, cheap at these channel counts).
# -----------------------------------------------------------------------------
def _im2col_3x3_s2(x_nhwc):
    """3x3 / stride-2 / pad-1 im2col: (N,H,W,C) -> (N, Ho*Wo, 9*C).

    HBM cost is 9x of a small tensor, which the review deems cheaper than the
    per-tap in-kernel slice materializations it replaces.
    """
    # TODO(synk): for large Cin switch back to a 4-phase space-to-depth layout
    # (1x HBM) with an in-kernel tap concat to avoid the 9x blowup.
    n, h, w, c = x_nhwc.shape
    ho = (h - 1) // 2 + 1
    wo = (w - 1) // 2 + 1
    he, we = 2 * ho + 1, 2 * wo + 1
    xp = jnp.pad(x_nhwc, ((0, 0), (1, he - h - 1), (1, we - w - 1), (0, 0)))
    cols = []
    for kh in range(3):
        for kw in range(3):
            cols.append(jax.lax.slice(
                xp, (0, kh, kw, 0),
                (n, kh + 2 * ho - 1, kw + 2 * wo - 1, c),
                (1, 2, 2, 1)))                                   # (n, ho, wo, c)
    cols = jnp.concatenate(cols, axis=-1)                        # (n, ho, wo, 9c)
    return cols.reshape(n, ho * wo, 9 * c)


def _conv3x3_s2_gn(x_nhwc, w_oihw, gamma, beta, *, apply_silu, pad_out_lanes,
                   out_dtype):
    """One fused Conv(3x3, s2, p1, bias=False) -> GroupNorm(1) -> (SiLU) stage."""
    n, h, w, cin = x_nhwc.shape
    cout = w_oihw.shape[0]
    assert w_oihw.shape[1] == cin
    ho = (h - 1) // 2 + 1
    wo = (w - 1) // 2 + 1
    p = ho * wo
    k = 9 * cin
    c_blk = _round_up(cout, _LANE) if pad_out_lanes else cout

    # bf16 activations feed the MXU; padding zeros are exact in bf16.
    cols = _im2col_3x3_s2(x_nhwc.astype(jnp.bfloat16))           # (n, p, 9*cin)

    # Weights [Cout, Cin, 3, 3] -> (kh, kw, Cin, Cout) -> (9*Cin, Cblk),
    # zero-padded output lanes; ordering matches the im2col tap order.
    w_t = jnp.transpose(w_oihw, (2, 3, 1, 0)).reshape(k, cout)
    w_t = jnp.pad(w_t, ((0, 0), (0, c_blk - cout))).astype(jnp.bfloat16)
    g2 = jnp.pad(gamma.astype(jnp.float32), (0, c_blk - cout)).reshape(1, 1, c_blk)
    b2 = jnp.pad(beta.astype(jnp.float32), (0, c_blk - cout)).reshape(1, 1, c_blk)

    # cdiv-based batch chunking (zero-padded tail) with >= 2 parallel steps.
    nb = _pick_nb(n, p)
    n_pad = _round_up(n, nb)
    if n_pad != n:
        cols = jnp.pad(cols, ((0, n_pad - n), (0, 0), (0, 0)))
    grid = (n_pad // nb,)
    # TODO(synk): for large H*W additionally tile the P axis (store-then-
    # normalize / two-pass GN across P tiles) so blocks fit v7x's 64 MiB VMEM.

    out_bytes = jnp.dtype(out_dtype).itemsize
    blk_bytes = (nb * p * k * 2 + k * c_blk * 2 + 2 * c_blk * 4
                 + nb * p * c_blk * out_bytes)
    vmem_limit = int(min(max(3 * blk_bytes, 16 * 2**20), _vmem_cap_bytes()))

    kernel = functools.partial(_conv_gn_act_kernel, c_true=cout,
                               apply_silu=apply_silu, eps=_GN_EPS)

    out = pl.pallas_call(
        kernel,
        out_shape=jax.ShapeDtypeStruct((n_pad, p, c_blk), out_dtype),
        grid_spec=pltpu.PrefetchScalarGridSpec(
            num_scalar_prefetch=0,
            grid=grid,
            in_specs=[
                pl.BlockSpec((nb, p, k), lambda i: (i, 0, 0)),
                pl.BlockSpec((k, c_blk), lambda i: (0, 0)),
                pl.BlockSpec((1, 1, c_blk), lambda i: (0, 0, 0)),
                pl.BlockSpec((1, 1, c_blk), lambda i: (0, 0, 0)),
            ],
            out_specs=pl.BlockSpec((nb, p, c_blk), lambda i: (i, 0, 0)),
        ),
        compiler_params=pltpu.CompilerParams(
            dimension_semantics=("parallel",),
            vmem_limit_bytes=vmem_limit,
        ),
    )(cols, w_t, g2, b2)

    if n_pad != n:
        out = out[:n]
    return out.reshape(n, ho, wo, c_blk)


# -----------------------------------------------------------------------------
# DoubleConv forward (NCHW in / NCHW out), matching the PyTorch module.
# -----------------------------------------------------------------------------
def double_conv_forward(x_nchw, params, residual=False):
    cout = params["w2"].shape[0]
    x_nhwc = jnp.transpose(x_nchw, (0, 2, 3, 1))          # NCHW -> NHWC (once)
    # Stage 1 carries TRUE mid channels between stages (no 16x lane-padded HBM
    # round-trip) and stores the intermediate in bf16.
    # TODO(synk): for very small N*P*C, fuse both stages into one pallas_call
    # keeping the stage-1 activation in VMEM scratch (skips this HBM hop).
    h = _conv3x3_s2_gn(x_nhwc, params["w1"], params["g1"], params["b1"],
                       apply_silu=True, pad_out_lanes=False,
                       out_dtype=jnp.bfloat16)
    # Stage 2: lane-dense (128-padded) final store; padded lanes dropped below.
    h = _conv3x3_s2_gn(h, params["w2"], params["g2"], params["b2"],
                       apply_silu=False, pad_out_lanes=True,
                       out_dtype=jnp.float32)
    out = jnp.transpose(h[..., :cout], (0, 3, 1, 2))       # -> NCHW
    if residual:
        # TODO(synk): residual=True is shape-incompatible with the stride-2
        # convs (as in the PyTorch module); only residual=False is exercised.
        out = jax.nn.gelu(x_nchw + out, approximate=False)
    return out


# -----------------------------------------------------------------------------
# Pure-JAX reference (lax.conv, same bf16 operand quantization) for checking.
# -----------------------------------------------------------------------------
def _reference_forward(x, params):
    bf = jnp.bfloat16

    def conv(h, w):
        return jax.lax.conv_general_dilated(
            h.astype(bf), w.astype(bf), window_strides=(2, 2),
            padding=((1, 1), (1, 1)),
            dimension_numbers=("NCHW", "OIHW", "NCHW"),
            preferred_element_type=jnp.float32)

    def gn(y, g, b):
        mu = jnp.mean(y, axis=(1, 2, 3), keepdims=True)
        var = jnp.mean(jnp.square(y - mu), axis=(1, 2, 3), keepdims=True)
        yn = (y - mu) * jax.lax.rsqrt(var + _GN_EPS)
        return yn * g.reshape(1, -1, 1, 1) + b.reshape(1, -1, 1, 1)

    h = gn(conv(x, params["w1"]), params["g1"], params["b1"])
    h = h * jax.nn.sigmoid(h)
    h = gn(conv(h, params["w2"]), params["g2"], params["b2"])
    return h


def init_params(key, in_channels, out_channels, mid_channels=None):
    if not mid_channels:
        mid_channels = out_channels
    k1, k2 = jax.random.split(key)
    return {
        # Conv2d(in, mid, 3, stride=2, pad=1, bias=False)
        "w1": 0.1 * jax.random.normal(k1, (mid_channels, in_channels, 3, 3),
                                      jnp.float32),
        # GroupNorm(1, mid) default affine init (weight=1, bias=0)
        "g1": jnp.ones((mid_channels,), jnp.float32),
        "b1": jnp.zeros((mid_channels,), jnp.float32),
        # Conv2d(mid, out, 3, stride=2, pad=1, bias=False)
        "w2": 0.1 * jax.random.normal(k2, (out_channels, mid_channels, 3, 3),
                                      jnp.float32),
        # GroupNorm(1, out)
        "g2": jnp.ones((out_channels,), jnp.float32),
        "b2": jnp.zeros((out_channels,), jnp.float32),
    }


if __name__ == "__main__":
    key = jax.random.PRNGKey(0)
    kx, kp = jax.random.split(key)

    # Small shapes: batch=2, in_channels=4, spatial=16x16, out_channels=8.
    x = jax.random.normal(kx, (2, 4, 16, 16), jnp.float32)
    params = init_params(kp, in_channels=4, out_channels=8)

    out = jax.block_until_ready(jax.jit(double_conv_forward)(x, params))
    assert out.shape == (2, 8, 4, 4), out.shape

    ref = jax.block_until_ready(_reference_forward(x, params))
    max_err = float(jnp.max(jnp.abs(out - ref)))
    assert jnp.allclose(out, ref, rtol=1e-2, atol=1e-2), max_err

    print("KERNEL_OK")
</pallas_src>

<mosaic_0001>
module attributes {stable_mosaic.version = 11 : i64} {
  func.func @_conv_gn_act_kernel(%arg0: i32, %arg1: memref<1x64x36xbf16, #tpu.memory_space<vmem>>, %arg2: memref<36x8xbf16, #tpu.memory_space<vmem>>, %arg3: memref<1x1x8xf32, #tpu.memory_space<vmem>>, %arg4: memref<1x1x8xf32, #tpu.memory_space<vmem>>, %arg5: memref<1x64x8xbf16, #tpu.memory_space<vmem>>) attributes {dimension_semantics = [#tpu.dimension_semantics<parallel>], iteration_bounds = array<i64: 2>, scalar_prefetch = 0 : i64, scratch_operands = 0 : i64, tpu.core_type = #tpu.core_type<tc>, window_params = [{transform_indices = @transform_0, window_bounds = array<i64: 1, 64, 36>}, {pipeline_mode = #tpu.pipeline_mode<synchronous>, transform_indices = @transform_1, window_bounds = array<i64: 36, 8>}, {pipeline_mode = #tpu.pipeline_mode<synchronous>, transform_indices = @transform_2, window_bounds = array<i64: 1, 1, 8>}, {pipeline_mode = #tpu.pipeline_mode<synchronous>, transform_indices = @transform_3, window_bounds = array<i64: 1, 1, 8>}, {transform_indices = @transform_4, window_bounds = array<i64: 1, 64, 8>}]} {
    %c0 = arith.constant 0 : index
    %c0_0 = arith.constant 0 : index
    %c0_1 = arith.constant 0 : index
    %0 = vector.load %arg1[%c0, %c0_0, %c0_1] : memref<1x64x36xbf16, #tpu.memory_space<vmem>>, vector<1x64x36xbf16>
    %1 = vector.shape_cast %0 : vector<1x64x36xbf16> to vector<64x36xbf16>
    %c0_2 = arith.constant 0 : index
    %c0_3 = arith.constant 0 : index
    %2 = vector.load %arg2[%c0_2, %c0_3] : memref<36x8xbf16, #tpu.memory_space<vmem>>, vector<36x8xbf16>
    %cst = arith.constant dense<0.000000e+00> : vector<64x8xf32>
    %3 = tpu.matmul %1, %2, %cst {dimension_numbers = #tpu.dot_dimension_numbers<[1], [0], [0], [1], [0, 0, 1, 1], [], []>} : vector<64x36xbf16>, vector<36x8xbf16>, vector<64x8xf32> -> vector<64x8xf32>
    %4 = vector.shape_cast %3 : vector<64x8xf32> to vector<1x64x8xf32>
    %cst_4 = arith.constant dense<0.000000e+00> : vector<1xf32>
    %5 = vector.multi_reduction <add>, %4, %cst_4 [1, 2] : vector<1x64x8xf32> to vector<1xf32>
    %6 = vector.shape_cast %5 : vector<1xf32> to vector<1x1x1xf32>
    %cst_5 = arith.constant 5.120000e+02 : f32
    %7 = vector.broadcast %cst_5 : f32 to vector<1x1x1xf32>
    %8 = arith.divf %6, %7 : vector<1x1x1xf32>
    %9 = vector.broadcast %8 : vector<1x1x1xf32> to vector<1x64x8xf32>
    %10 = arith.subf %4, %9 : vector<1x64x8xf32>
    %11 = arith.mulf %10, %10 : vector<1x64x8xf32>
    %cst_6 = arith.constant dense<0.000000e+00> : vector<1xf32>
    %12 = vector.multi_reduction <add>, %11, %cst_6 [1, 2] : vector<1x64x8xf32> to vector<1xf32>
    %13 = vector.shape_cast %12 : vector<1xf32> to vector<1x1x1xf32>
    %cst_7 = arith.constant 5.120000e+02 : f32
    %14 = vector.broadcast %cst_7 : f32 to vector<1x1x1xf32>
    %15 = arith.divf %13, %14 : vector<1x1x1xf32>
    %cst_8 = arith.constant 9.99999974E-6 : f32
    %16 = vector.broadcast %cst_8 : f32 to vector<1x1x1xf32>
    %17 = arith.addf %15, %16 : vector<1x1x1xf32>
    %18 = math.rsqrt %17 : vector<1x1x1xf32>
    %19 = vector.broadcast %18 : vector<1x1x1xf32> to vector<1x64x8xf32>
    %20 = arith.mulf %10, %19 : vector<1x64x8xf32>
    %c0_9 = arith.constant 0 : index
    %c0_10 = arith.constant 0 : index
    %c0_11 = arith.constant 0 : index
    %21 = vector.load %arg3[%c0_9, %c0_10, %c0_11] : memref<1x1x8xf32, #tpu.memory_space<vmem>>, vector<1x1x8xf32>
    %22 = vector.broadcast %21 : vector<1x1x8xf32> to vector<1x64x8xf32>
    %23 = arith.mulf %20, %22 : vector<1x64x8xf32>
    %c0_12 = arith.constant 0 : index
    %c0_13 = arith.constant 0 : index
    %c0_14 = arith.constant 0 : index
    %24 = vector.load %arg4[%c0_12, %c0_13, %c0_14] : memref<1x1x8xf32, #tpu.memory_space<vmem>>, vector<1x1x8xf32>
    %25 = vector.broadcast %24 : vector<1x1x8xf32> to vector<1x64x8xf32>
    %26 = arith.addf %23, %25 : vector<1x64x8xf32>
    %27 = arith.negf %26 : vector<1x64x8xf32>
    %28 = math.exp %27 : vector<1x64x8xf32>
    %cst_15 = arith.constant 1.000000e+00 : f32
    %29 = vector.broadcast %cst_15 : f32 to vector<1x64x8xf32>
    %30 = arith.addf %29, %28 : vector<1x64x8xf32>
    %31 = arith.divf %29, %30 : vector<1x64x8xf32>
    %32 = arith.mulf %26, %31 : vector<1x64x8xf32>
    %33 = arith.truncf %32 : vector<1x64x8xf32> to vector<1x64x8xbf16>
    %c0_16 = arith.constant 0 : index
    %c0_17 = arith.constant 0 : index
    %c0_18 = arith.constant 0 : index
    %34 = vector.load %arg5[%c0_16, %c0_17, %c0_18] : memref<1x64x8xbf16, #tpu.memory_space<vmem>>, vector<1x64x8xbf16>
    tpu.vector_store %arg5[%c0_16, %c0_17, %c0_18], %33 {strides = array<i32>} : memref<1x64x8xbf16, #tpu.memory_space<vmem>>, vector<1x64x8xbf16>,
    return
  }
  func.func @transform_0(%arg0: i32) -> (i32, i32, i32) {
    %c0_i32 = arith.constant 0 : i32
    %c0_i32_0 = arith.constant 0 : i32
    %c0_i32_1 = arith.constant 0 : i32
    return %arg0, %c0_i32, %c0_i32_0 : i32, i32, i32
  }
  func.func @transform_1(%arg0: i32) -> (i32, i32) {
    %c0_i32 = arith.constant 0 : i32
    %c0_i32_0 = arith.constant 0 : i32
    %c0_i32_1 = arith.constant 0 : i32
    return %c0_i32, %c0_i32_0 : i32, i32
  }
  func.func @transform_2(%arg0: i32) -> (i32, i32, i32) {
    %c0_i32 = arith.constant 0 : i32
    %c0_i32_0 = arith.constant 0 : i32
    %c0_i32_1 = arith.constant 0 : i32
    %c0_i32_2 = arith.constant 0 : i32
    return %c0_i32, %c0_i32_0, %c0_i32_1 : i32, i32, i32
  }
  func.func @transform_3(%arg0: i32) -> (i32, i32, i32) {
    %c0_i32 = arith.constant 0 : i32
    %c0_i32_0 = arith.constant 0 : i32
    %c0_i32_1 = arith.constant 0 : i32
    %c0_i32_2 = arith.constant 0 : i32
    return %c0_i32, %c0_i32_0, %c0_i32_1 : i32, i32, i32
  }
  func.func @transform_4(%arg0: i32) -> (i32, i32, i32) {
    %c0_i32 = arith.constant 0 : i32
    %c0_i32_0 = arith.constant 0 : i32
    %c0_i32_1 = arith.constant 0 : i32
    return %arg0, %c0_i32, %c0_i32_0 : i32, i32, i32
  }
}

module attributes {stable_mosaic.version = 11 : i64} {
  func.func @_conv_gn_act_kernel(%arg0: i32, %arg1: memref<1x16x72xbf16, #tpu.memory_space<vmem>>, %arg2: memref<72x128xbf16, #tpu.memory_space<vmem>>, %arg3: memref<1x1x128xf32, #tpu.memory_space<vmem>>, %arg4: memref<1x1x128xf32, #tpu.memory_space<vmem>>, %arg5: memref<1x16x128xf32, #tpu.memory_space<vmem>>) attributes {dimension_semantics = [#tpu.dimension_semantics<parallel>], iteration_bounds = array<i64: 2>, scalar_prefetch = 0 : i64, scratch_operands = 0 : i64, tpu.core_type = #tpu.core_type<tc>, window_params = [{transform_indices = @transform_0, window_bounds = array<i64: 1, 16, 72>}, {pipeline_mode = #tpu.pipeline_mode<synchronous>, transform_indices = @transform_1, window_bounds = array<i64: 72, 128>}, {pipeline_mode = #tpu.pipeline_mode<synchronous>, transform_indices = @transform_2, window_bounds = array<i64: 1, 1, 128>}, {pipeline_mode = #tpu.pipeline_mode<synchronous>, transform_indices = @transform_3, window_bounds = array<i64: 1, 1, 128>}, {transform_indices = @transform_4, window_bounds = array<i64: 1, 16, 128>}]} {
    %c0 = arith.constant 0 : index
    %c0_0 = arith.constant 0 : index
    %c0_1 = arith.constant 0 : index
    %0 = vector.load %arg1[%c0, %c0_0, %c0_1] : memref<1x16x72xbf16, #tpu.memory_space<vmem>>, vector<1x16x72xbf16>
    %1 = vector.shape_cast %0 : vector<1x16x72xbf16> to vector<16x72xbf16>
    %c0_2 = arith.constant 0 : index
    %c0_3 = arith.constant 0 : index
    %2 = vector.load %arg2[%c0_2, %c0_3] : memref<72x128xbf16, #tpu.memory_space<vmem>>, vector<72x128xbf16>
    %cst = arith.constant dense<0.000000e+00> : vector<16x128xf32>
    %3 = tpu.matmul %1, %2, %cst {dimension_numbers = #tpu.dot_dimension_numbers<[1], [0], [0], [1], [0, 0, 1, 1], [], []>} : vector<16x72xbf16>, vector<72x128xbf16>, vector<16x128xf32> -> vector<16x128xf32>
    %4 = vector.shape_cast %3 : vector<16x128xf32> to vector<1x16x128xf32>
    %cst_4 = arith.constant dense<0.000000e+00> : vector<1xf32>
    %5 = vector.multi_reduction <add>, %4, %cst_4 [1, 2] : vector<1x16x128xf32> to vector<1xf32>
    %6 = vector.shape_cast %5 : vector<1xf32> to vector<1x1x1xf32>
    %cst_5 = arith.constant 1.280000e+02 : f32
    %7 = vector.broadcast %cst_5 : f32 to vector<1x1x1xf32>
    %8 = arith.divf %6, %7 : vector<1x1x1xf32>
    %9 = vector.broadcast %8 : vector<1x1x1xf32> to vector<1x16x128xf32>
    %10 = arith.subf %4, %9 : vector<1x16x128xf32>
    %11 = tpu.iota {dimensions = array<i32: 2>} : vector<1x1x128xi32>
    %c8_i32 = arith.constant 8 : i32
    %12 = vector.broadcast %c8_i32 : i32 to vector<1x1x128xi32>
    %13 = arith.cmpi slt, %11, %12 : vector<1x1x128xi32>
    %cst_6 = arith.constant 0.000000e+00 : f32
    %14 = vector.shape_cast %13 : vector<1x1x128xi1> to vector<1x1x128xi1>
    %15 = vector.broadcast %14 : vector<1x1x128xi1> to vector<1x16x128xi1>
    %16 = vector.broadcast %cst_6 : f32 to vector<1x16x128xf32>
    %17 = arith.select %15, %10, %16 : vector<1x16x128xi1>, vector<1x16x128xf32>
    %18 = arith.mulf %17, %17 : vector<1x16x128xf32>
    %cst_7 = arith.constant dense<0.000000e+00> : vector<1xf32>
    %19 = vector.multi_reduction <add>, %18, %cst_7 [1, 2] : vector<1x16x128xf32> to vector<1xf32>
    %20 = vector.shape_cast %19 : vector<1xf32> to vector<1x1x1xf32>
    %cst_8 = arith.constant 1.280000e+02 : f32
    %21 = vector.broadcast %cst_8 : f32 to vector<1x1x1xf32>
    %22 = arith.divf %20, %21 : vector<1x1x1xf32>
    %cst_9 = arith.constant 9.99999974E-6 : f32
    %23 = vector.broadcast %cst_9 : f32 to vector<1x1x1xf32>
    %24 = arith.addf %22, %23 : vector<1x1x1xf32>
    %25 = math.rsqrt %24 : vector<1x1x1xf32>
    %26 = vector.broadcast %25 : vector<1x1x1xf32> to vector<1x16x128xf32>
    %27 = arith.mulf %17, %26 : vector<1x16x128xf32>
    %c0_10 = arith.constant 0 : index
    %c0_11 = arith.constant 0 : index
    %c0_12 = arith.constant 0 : index
    %28 = vector.load %arg3[%c0_10, %c0_11, %c0_12] : memref<1x1x128xf32, #tpu.memory_space<vmem>>, vector<1x1x128xf32>
    %29 = vector.broadcast %28 : vector<1x1x128xf32> to vector<1x16x128xf32>
    %30 = arith.mulf %27, %29 : vector<1x16x128xf32>
    %c0_13 = arith.constant 0 : index
    %c0_14 = arith.constant 0 : index
    %c0_15 = arith.constant 0 : index
    %31 = vector.load %arg4[%c0_13, %c0_14, %c0_15] : memref<1x1x128xf32, #tpu.memory_space<vmem>>, vector<1x1x128xf32>
    %32 = vector.broadcast %31 : vector<1x1x128xf32> to vector<1x16x128xf32>
    %33 = arith.addf %30, %32 : vector<1x16x128xf32>
    %c0_16 = arith.constant 0 : index
    %c0_17 = arith.constant 0 : index
    %c0_18 = arith.constant 0 : index
    %34 = vector.load %arg5[%c0_16, %c0_17, %c0_18] : memref<1x16x128xf32, #tpu.memory_space<vmem>>, vector<1x16x128xf32>
    tpu.vector_store %arg5[%c0_16, %c0_17, %c0_18], %33 {strides = array<i32>} : memref<1x16x128xf32, #tpu.memory_space<vmem>>, vector<1x16x128xf32>,
    return
  }
  func.func @transform_0(%arg0: i32) -> (i32, i32, i32) {
    %c0_i32 = arith.constant 0 : i32
    %c0_i32_0 = arith.constant 0 : i32
    %c0_i32_1 = arith.constant 0 : i32
    return %arg0, %c0_i32, %c0_i32_0 : i32, i32, i32
  }
  func.func @transform_1(%arg0: i32) -> (i32, i32) {
    %c0_i32 = arith.constant 0 : i32
    %c0_i32_0 = arith.constant 0 : i32
    %c0_i32_1 = arith.constant 0 : i32
    return %c0_i32, %c0_i32_0 : i32, i32
  }
  func.func @transform_2(%arg0: i32) -> (i32, i32, i32) {
    %c0_i32 = arith.constant 0 : i32
    %c0_i32_0 = arith.constant 0 : i32
    %c0_i32_1 = arith.constant 0 : i32
    %c0_i32_2 = arith.constant 0 : i32
    return %c0_i32, %c0_i32_0, %c0_i32_1 : i32, i32, i32
  }
  func.func @transform_3(%arg0: i32) -> (i32, i32, i32) {
    %c0_i32 = arith.constant 0 : i32
    %c0_i32_0 = arith.constant 0 : i32
    %c0_i32_1 = arith.constant 0 : i32
    %c0_i32_2 = arith.constant 0 : i32
    return %c0_i32, %c0_i32_0, %c0_i32_1 : i32, i32, i32
  }
  func.func @transform_4(%arg0: i32) -> (i32, i32, i32) {
    %c0_i32 = arith.constant 0 : i32
    %c0_i32_0 = arith.constant 0 : i32
    %c0_i32_1 = arith.constant 0 : i32
    return %arg0, %c0_i32, %c0_i32_0 : i32, i32, i32
  }
}

</mosaic_0001>

<llo_original>
// kernel: double_conv_forward.2
$region0: #{double_conv_forward.2}
  #allocation0 [shape = 'u32[]', space=smem, size = 0x4, offset = 0x4, fixed_abs, tag = 'smem constant byte address 0x4 - core index']
  #allocation1 [shape = 'u32[72,128]{1,0:T(1,128)}', space=vmem, size = 0x9000, scoped, tag = 'internal scratch']
  %s0 = inlined_call_operand.vmem [shape: bf16[2,64,36], index: 0, kind: input, shape index: {}]
  %s1 = inlined_call_operand.vmem [shape: bf16[36,8], index: 1, kind: input, shape index: {}]
  %s2 = inlined_call_operand.vmem [shape: f32[1,1,8], index: 2, kind: input, shape index: {}]
  %s3 = inlined_call_operand.vmem [shape: f32[1,1,8], index: 3, kind: input, shape index: {}]
  %s4 = inlined_call_operand.vmem [shape: bf16[2,64,8], index: 4, kind: output, shape index: {}]
  %s5 = sld [smem:[#allocation0]]
  $region49: #{double_conv_forward.2} parent=0
    _
  %s7 = ssub.s32 1, %s5
  %s8 = scalar_select 0, %s7, %s5
  loop: start=0, step=1, limit=4
  $region2: #{double_conv_forward.2} parent=0 // loop_pre_header
    _
  $region3: #{double_conv_forward.2} parent=0 // loop_header
    %s10 = sphi 0, %s14
    %p11 = scmp.ge.s32.totalorder %s10, 4
    %s20 = sphi 0, %s22
    %s23 = sphi 0, %s20
    %s24 = sphi 0, %s23
    %s40 = sphi 0, %s24
    %s44 = sphi 0, %s44
    %s46 = sphi 0, %s44
    %s47 = sphi 0, %s46
    %s61 = sphi 0, %s47
    %s65 = sphi 0, %s65
    %s67 = sphi 0, %s65
    %s68 = sphi 0, %s67
    %s82 = sphi 0, %s68
    %s86 = sphi 0, %s86
    %s88 = sphi 0, %s86
    %s89 = sphi 0, %s88
    %s103 = sphi 0, %s89
    %s109 = sphi 0, %s111
    %s112 = sphi 0, %s109
    %s113 = sphi 0, %s112
    %s129 = sphi 0, %s113
  $region4: #{double_conv_forward.2} parent=0 // loop_header_branch
    %13 = sbr.rel (%p11) target = $region8
  $region5: #{double_conv_forward.2} parent=0 // loop_body
    %s15 = ssub.s32 %s10, 1
    %s16 = ssub.s32 %s10, 2
    %s17 = sadd.s32 %s10, 1
    %s18 = ssub.s32 %s10, %s17
    %p19 = scmp.eq.s32.totalorder %s18, 0
    %s21 = sadd.s32 %s20, 1
    %s22 = scalar_select %p19, %s20, %s21
    %p25 = pneg %p19
    %p26 = scmp.eq.s32.totalorder %s10, 1
    %p27 = por %p25, %p26
    %p28 = scmp.ne.s32.totalorder %s20, %s23
    %p29 = scmp.eq.s32.totalorder %s10, 0
    %p30 = por %p28, %p29
    %p31 = scmp.ne.s32.totalorder %s20, %s23
    %p32 = scmp.eq.s32.totalorder %s15, 1
    %p33 = por %p31, %p32
    %p34 = scmp.ne.s32.totalorder %s23, %s24
    %p35 = scmp.eq.s32.totalorder %s15, 0
    %p36 = por %p34, %p35
    %p37 = scmp.ne.s32.totalorder %s23, %s24
    %p38 = scmp.eq.s32.totalorder %s16, 1
    %p39 = por %p37, %p38
    %p41 = scmp.ne.s32.totalorder %s24, %s40
    %p42 = scmp.eq.s32.totalorder %s16, 0
    %p43 = por %p41, %p42
    %s45 = sadd.s32 %s44, 1
    %p48 = scmp.eq.s32.totalorder %s10, 1
    %p49 = scmp.ne.s32.totalorder %s44, %s46
    %p50 = scmp.eq.s32.totalorder %s10, 0
    %p51 = por %p49, %p50
    %p52 = scmp.ne.s32.totalorder %s44, %s46
    %p53 = scmp.eq.s32.totalorder %s15, 1
    %p54 = por %p52, %p53
    %p55 = scmp.ne.s32.totalorder %s46, %s47
    %p56 = scmp.eq.s32.totalorder %s15, 0
    %p57 = por %p55, %p56
    %p58 = scmp.ne.s32.totalorder %s46, %s47
    %p59 = scmp.eq.s32.totalorder %s16, 1
    %p60 = por %p58, %p59
    %p62 = scmp.ne.s32.totalorder %s47, %s61
    %p63 = scmp.eq.s32.totalorder %s16, 0
    %p64 = por %p62, %p63
    %s66 = sadd.s32 %s65, 1
    %p69 = scmp.eq.s32.totalorder %s10, 1
    %p70 = scmp.ne.s32.totalorder %s65, %s67
    %p71 = scmp.eq.s32.totalorder %s10, 0
    %p72 = por %p70, %p71
    %p73 = scmp.ne.s32.totalorder %s65, %s67
    %p74 = scmp.eq.s32.totalorder %s15, 1
    %p75 = por %p73, %p74
    %p76 = scmp.ne.s32.totalorder %s67, %s68
    %p77 = scmp.eq.s32.totalorder %s15, 0
    %p78 = por %p76, %p77
    %p79 = scmp.ne.s32.totalorder %s67, %s68
    %p80 = scmp.eq.s32.totalorder %s16, 1
    %p81 = por %p79, %p80
    %p83 = scmp.ne.s32.totalorder %s68, %s82
    %p84 = scmp.eq.s32.totalorder %s16, 0
    %p85 = por %p83, %p84
    %s87 = sadd.s32 %s86, 1
    %p90 = scmp.eq.s32.totalorder %s10, 1
    %p91 = scmp.ne.s32.totalorder %s86, %s88
    %p92 = scmp.eq.s32.totalorder %s10, 0
    %p93 = por %p91, %p92
    %p94 = scmp.ne.s32.totalorder %s86, %s88
    %p95 = scmp.eq.s32.totalorder %s15, 1
    %p96 = por %p94, %p95
    %p97 = scmp.ne.s32.totalorder %s88, %s89
    %p98 = scmp.eq.s32.totalorder %s15, 0
    %p99 = por %p97, %p98
    %p100 = scmp.ne.s32.totalorder %s88, %s89
    %p101 = scmp.eq.s32.totalorder %s16, 1
    %p102 = por %p100, %p101
    %p104 = scmp.ne.s32.totalorder %s89, %s103
    %p105 = scmp.eq.s32.totalorder %s16, 0
    %p106 = por %p104, %p105
    %s107 = ssub.s32 %s10, %s17
    %p108 = scmp.eq.s32.totalorder %s107, 0
    %s110 = sadd.s32 %s109, 1
    %s111 = scalar_select %p108, %s109, %s110
    %p114 = pneg %p108
    %p115 = scmp.eq.s32.totalorder %s10, 1
    %p116 = por %p114, %p115
    %p117 = scmp.ne.s32.totalorder %s109, %s112
    %p118 = scmp.eq.s32.totalorder %s10, 0
    %p119 = por %p117, %p118
    %p120 = scmp.ne.s32.totalorder %s109, %s112
    %p121 = scmp.eq.s32.totalorder %s15, 1
    %p122 = por %p120, %p121
    %p123 = scmp.ne.s32.totalorder %s112, %s113
    %p124 = scmp.eq.s32.totalorder %s15, 0
    %p125 = por %p123, %p124
    %p126 = scmp.ne.s32.totalorder %s112, %s113
    %p127 = scmp.eq.s32.totalorder %s16, 1
    %p128 = por %p126, %p127
    %p130 = scmp.ne.s32.totalorder %s113, %s129
    %p131 = scmp.eq.s32.totalorder %s16, 0
    %p132 = por %p130, %p131
    %p133 = scmp.le.s32.totalorder 1, %s10
    %p134 = scmp.lt.s32.totalorder %s10, 3
    %p135 = pnand %p133, %p134
    %p136 = pneg %p135
    // Predicated region
    $region9: #{double_conv_forward.2} parent=5 // pred_check
      _
    $region10: #{double_conv_forward.2} parent=5 // pred_check_branch
      %138 = sbr.rel (%p135) target = $region12
    $region11: #{double_conv_forward.2} parent=5 // pred_region
      %s139 = ssub.s32 %s10, 1
      // Predicated region
      $region13: #{double_conv_forward.2} parent=11 // pred_check
        %p140 = pneg %p57
      $region14: #{double_conv_forward.2} parent=11 // pred_check_branch
        %142 = sbr.rel (%p140) target = $region16
      $region15: #{double_conv_forward.2} parent=11 // pred_region
        _
      $region16: #{double_conv_forward.2} parent=11 // pred_fallthru
        _
      // Predicated region
      $region17: #{double_conv_forward.2} parent=11 // pred_check
        %p143 = pneg %p78
      $region18: #{double_conv_forward.2} parent=11 // pred_check_branch
        %145 = sbr.rel (%p143) target = $region20
      $region19: #{double_conv_forward.2} parent=11 // pred_region
        _
      $region20: #{double_conv_forward.2} parent=11 // pred_fallthru
        _
      // Predicated region
      $region21: #{double_conv_forward.2} parent=11 // pred_check
        %p146 = pneg %p99
      $region22: #{double_conv_forward.2} parent=11 // pred_check_branch
        %148 = sbr.rel (%p146) target = $region24
      $region23: #{double_conv_forward.2} parent=11 // pred_region
        _
      $region24: #{double_conv_forward.2} parent=11 // pred_fallthru
        _
    $region12: #{double_conv_forward.2} parent=5 // pred_fallthru
      _
    %p149 = scmp.lt.s32.totalorder %s10, 2
    // Predicated region
    $region25: #{double_conv_forward.2} parent=5 // pred_check
      %p150 = pneg %p149
    $region26: #{double_conv_forward.2} parent=5 // pred_check_branch
      %152 = sbr.rel (%p150) target = $region28
    $region27: #{double_conv_forward.2} parent=5 // pred_region
      // Predicated region
      $region29: #{double_conv_forward.2} parent=27 // pred_check
        %p153 = pneg %p30
      $region30: #{double_conv_forward.2} parent=27 // pred_check_branch
        %155 = sbr.rel (%p153) target = $region32
      $region31: #{double_conv_forward.2} parent=27 // pred_region
        %p156 = scmp.lt.s32.totalorder %s10, 1
        %s157 = scalar_select %p156, %s10, 1
        %s158 = smul.addr %s157, 8
        %s159 = smul.addr %s158, 4
        %s160 = scalar_lea.vmem %s0, %s159
      $region32: #{double_conv_forward.2} parent=27 // pred_fallthru
        _
    $region28: #{double_conv_forward.2} parent=5 // pred_fallthru
      _
    %p161 = scmp.le.s32.totalorder 1, %s10
    %p162 = scmp.lt.s32.totalorder %s10, 3
    %p163 = pnand %p161, %p162
    %p164 = pneg %p163
    // Predicated region
    $region33: #{double_conv_forward.2} parent=5 // pred_check
      _
    $region34: #{double_conv_forward.2} parent=5 // pred_check_branch
      %166 = sbr.rel (%p163) target = $region36
    $region35: #{double_conv_forward.2} parent=5 // pred_region
      %s167 = ssub.s32 %s10, 1
      %p168 = scmp.lt.s32.totalorder %s15, 1
      %s169 = scalar_select %p168, %s15, 1
      %s170 = smul.addr %s169, 8
      %s171 = smul.addr %s170, 4
      %s172 = scalar_lea.vmem %s0, %s171
      %p173 = pneg %p36
      %p174 = pneg %p33
      %p175 = pneg %p57
      %p176 = pneg %p54
      %p177 = pneg %p78
      %p178 = pneg %p75
      %p179 = pneg %p99
      %p180 = pneg %p96
      %p181 = pneg %p125
      %p182 = pneg %p122
      %p183 = scmp.lt.s32.totalorder %s15, 1
      %s184 = scalar_select %p183, %s15, 1
      %s185 = smul.addr %s184, 8
      %s186 = smul.addr %s185, 4
      %s187 = scalar_lea.vmem %s4, %s186
      %p188 = scmp.lt.s32.totalorder %s15, 1
      %s189 = scalar_select %p188, %s15, 1
      %s190 = smul.addr %s189, 8
      %s191 = smul.addr %s190, 4
      %s192 = scalar_lea.vmem %s0, %s191
      %p193 = scmp.lt.s32.totalorder %s15, 1
      %s194 = scalar_select %p193, %s15, 1
      %s195 = smul.addr %s194, 8
      %s196 = smul.addr %s195, 4
      %s197 = scalar_lea.vmem %s4, %s196
      %v199 = vld [vmem:[%s192] sm:$0xf]
      %v200 = vld [vmem:[%s192 + $0x4] sm:$0xf]
      %v201 = vld [vmem:[%s192 + $0x8] sm:$0xf]
      %v202 = vld [vmem:[%s192 + $0xc] sm:$0xf]
      %v203 = vld [vmem:[%s192 + $0x10] sm:$0xf]
      %v204 = vld [vmem:[%s192 + $0x14] sm:$0xf]
      %v205 = vld [vmem:[%s192 + $0x18] sm:$0xf]
      %v206 = vld [vmem:[%s192 + $0x1c] sm:$0xf]
      %v207 = vld [vmem:[%s1] sm:$0xf]
      %v208 = vld [vmem:[%s1 + $0x4] sm:$0xf]
      %v209 = vld [vmem:[%s1 + $0x8] sm:$0xf]
      %v210 = vld [vmem:[%s1 + $0xc] sm:$0xf]
      %v211 = vld [vmem:[%s1 + $0x10] sm:$0x3]
      %v220 = vunpack.c.l.b16 %v199
      %v221 = vunpack.c.l.b16 %v200
      %v222 = vunpack.c.l.b16 %v201
      %v223 = vunpack.c.l.b16 %v202
      %v224 = vunpack.c.l.b16 %v203
      %v225 = vunpack.c.l.b16 %v204
      %v226 = vunpack.c.l.b16 %v205
      %v227 = vunpack.c.l.b16 %v206
      %v228 = vpack.c.b16 %v221, %v220
      %v229 = vpack.c.b16 %v223, %v222
      %v230 = vpack.c.b16 %v225, %v224
      %v231 = vpack.c.b16 %v227, %v226
      %v237 = vunpack.c.l.b16 %v207
      %v238 = vunpack.c.l.b16 %v208
      %v239 = vunpack.c.l.b16 %v209
      %v240 = vunpack.c.l.b16 %v210
      %v241 = vunpack.c.l.b16 %v211
      %v242 = vpack.c.b16 %v238, %v237
      %v243 = vpack.c.b16 %v240, %v239
      %v244 = vpack.c.b16 %v241, %v241
      %vm247 = vcmask 293888
      %v249 = vsel %vm247, %v228, 0
      %v252 = vsel %vm247, %v229, 0
      %v255 = vsel %vm247, %v230, 0
      %v258 = vsel %vm247, %v231, 0
      %vm260 = vcmask 1041408
      %v262 = vsel %vm260, %v244, 0
      %264 = vmatpush.bf16.msra.mxu0 0
      %265 = vmatpush.bf16.msra.mxu0 0
      %266 = vmatpush.bf16.msra.mxu0 0
      %267 = vmatpush.bf16.msra.mxu0 0
      %268 = vmatpush.bf16.msra.mxu0 0
      %269 = vmatpush.bf16.msra.mxu0 %v262
      %270 = vmatpush.bf16.msra.mxu0 %v243
      %271 = vmatpush.bf16.msra.mxu0 %v242
      %272 = vmatmul.bf16.gmra.mxu0 %v249
      %v273 = vpop.f32.mrf.mxu0
      %v274 = vadd.f32 0.0, %v273
      %v275 = vpop.f32.mrf.mxu0
      %v276 = vadd.f32 0.0, %v275
      %277 = vmatmul.bf16.gmra.mxu0 %v252
      %v278 = vpop.f32.mrf.mxu0
      %v279 = vadd.f32 0.0, %v278
      %v280 = vpop.f32.mrf.mxu0
      %v281 = vadd.f32 0.0, %v280
      %282 = vmatmul.bf16.gmra.mxu0 %v255
      %v283 = vpop.f32.mrf.mxu0
      %v284 = vadd.f32 0.0, %v283
      %v285 = vpop.f32.mrf.mxu0
      %v286 = vadd.f32 0.0, %v285
      %287 = vmatmul.bf16.gmra.mxu0 %v258
      %v288 = vpop.f32.mrf.mxu0
      %v289 = vadd.f32 0.0, %v288
      %v290 = vpop.f32.mrf.mxu0
      %v291 = vadd.f32 0.0, %v290
      %292 = vdwg.mxu0
      %vm293 = vcmask 64512
      %v294 = vsel %vm293, %v274, 0.0
      %v295 = vsel %vm293, %v276, 0.0
      %v296 = vadd.f32 %v294, %v295
      %v297 = vsel %vm293, %v279, 0.0
      %v298 = vadd.f32 %v296, %v297
      %v299 = vsel %vm293, %v281, 0.0
      %v300 = vadd.f32 %v298, %v299
      %v301 = vsel %vm293, %v284, 0.0
      %v302 = vadd.f32 %v300, %v301
      %v303 = vsel %vm293, %v286, 0.0
      %v304 = vadd.f32 %v302, %v303
      %v305 = vsel %vm293, %v289, 0.0
      %v306 = vadd.f32 %v304, %v305
      %v307 = vsel %vm293, %v291, 0.0
      %v308 = vadd.f32 %v306, %v307
      %309 = vadd.xlane.f32.xlu0 %v308
      %v310 = vpop.xlane.xlu0 %309
      %v311 = vrot.slane %v310, 4
      %v312 = vadd.f32 %v310, %v311
      %v313 = vrot.slane %v312, 2
      %v314 = vadd.f32 %v312, %v313
      %v315 = vrot.slane %v314, 1
      %v316 = vadd.f32 %v314, %v315
      %v317 = vrcp.pop 512.0
      %v318 = vmul.f32 512.0, %v317
      %v319 = vsub.f32 1.0, %v318
      %v320 = vmul.f32 %v317, %v319
      %v321 = vadd.f32 %v317, %v320
      %vm322 = vweird.f32 %v317
      %v323 = vsel %vm322, %v317, %v321
      %v324 = vmul.f32 %v316, %v323
      %v325 = vsub.f32 %v274, %v324
      %v326 = vsub.f32 %v276, %v324
      %v327 = vsub.f32 %v279, %v324
      %v328 = vsub.f32 %v281, %v324
      %v329 = vsub.f32 %v284, %v324
      %v330 = vsub.f32 %v286, %v324
      %v331 = vsub.f32 %v289, %v324
      %v332 = vsub.f32 %v291, %v324
      %v333 = vmul.f32 %v325, %v325
      %v334 = vmul.f32 %v326, %v326
      %v335 = vmul.f32 %v327, %v327
      %v336 = vmul.f32 %v328, %v328
      %v337 = vmul.f32 %v329, %v329
      %v338 = vmul.f32 %v330, %v330
      %v339 = vmul.f32 %v331, %v331
      %v340 = vmul.f32 %v332, %v332
      %v341 = vsel %vm293, %v333, 0.0
      %v342 = vsel %vm293, %v334, 0.0
      %v343 = vadd.f32 %v341, %v342
      %v344 = vsel %vm293, %v335, 0.0
      %v345 = vadd.f32 %v343, %v344
      %v346 = vsel %vm293, %v336, 0.0
      %v347 = vadd.f32 %v345, %v346
      %v348 = vsel %vm293, %v337, 0.0
      %v349 = vadd.f32 %v347, %v348
      %v350 = vsel %vm293, %v338, 0.0
      %v351 = vadd.f32 %v349, %v350
      %v352 = vsel %vm293, %v339, 0.0
      %v353 = vadd.f32 %v351, %v352
      %v354 = vsel %vm293, %v340, 0.0
      %v355 = vadd.f32 %v353, %v354
      %356 = vadd.xlane.f32.xlu0 %v355
      %v357 = vpop.xlane.xlu0 %356
      %v358 = vrot.slane %v357, 4
      %v359 = vadd.f32 %v357, %v358
      %v360 = vrot.slane %v359, 2
      %v361 = vadd.f32 %v359, %v360
      %v362 = vrot.slane %v361, 1
      %v363 = vadd.f32 %v361, %v362
      %v364 = vmul.f32 %v363, %v323
      %v365 = vadd.f32 %v364, 1e-05
      %v366 = vrsqrt.pop %v365
      %v367 = vmul.f32 %v366, %v365
      %v368 = vmul.f32 %v367, %v366
      %v369 = vmul.f32 0.5, %v368
      %v370 = vsub.f32 1.5, %v369
      %v371 = vmul.f32 %v366, %v370
      %vm372 = vweird.f32 %v365
      %vm373 = vweird.f32 %v366
      %vm374 = vmor %vm372, %vm373
      %v375 = vsel %vm374, %v366, %v371
      %v376 = vmul.f32 %v325, %v375
      %v377 = vmul.f32 %v326, %v375
      %v378 = vmul.f32 %v327, %v375
      %v379 = vmul.f32 %v328, %v375
      %v380 = vmul.f32 %v329, %v375
      %v381 = vmul.f32 %v330, %v375
      %v382 = vmul.f32 %v331, %v375
      %v383 = vmul.f32 %v332, %v375
      %v384 = vld [vmem:[%s2] sm:$0x1]
      %v386 = vperm.slane %v384, 0
      %v388 = vmul.f32 %v376, %v386
      %v389 = vmul.f32 %v377, %v386
      %v390 = vmul.f32 %v378, %v386
      %v391 = vmul.f32 %v379, %v386
      %v392 = vmul.f32 %v380, %v386
      %v393 = vmul.f32 %v381, %v386
      %v394 = vmul.f32 %v382, %v386
      %v395 = vmul.f32 %v383, %v386
      %v396 = vld [vmem:[%s3] sm:$0x1]
      %v398 = vperm.slane %v396, 0
      %v400 = vadd.f32 %v388, %v398
      %v401 = vadd.f32 %v389, %v398
      %v402 = vadd.f32 %v390, %v398
      %v403 = vadd.f32 %v391, %v398
      %v404 = vadd.f32 %v392, %v398
      %v405 = vadd.f32 %v393, %v398
      %v406 = vadd.f32 %v394, %v398
      %v407 = vadd.f32 %v395, %v398
      %v408 = vxor.u32 %v400, 2147483648
      %v409 = vxor.u32 %v401, 2147483648
      %v410 = vxor.u32 %v402, 2147483648
      %v411 = vxor.u32 %v403, 2147483648
      %v412 = vxor.u32 %v404, 2147483648
      %v413 = vxor.u32 %v405, 2147483648
      %v414 = vxor.u32 %v406, 2147483648
      %v415 = vxor.u32 %v407, 2147483648
      %v416 = vmul.f32 %v408, 1.442695
      %v417 = vpow.pop %v416
      %v418 = vmul.f32 %v409, 1.442695
      %v419 = vpow.pop %v418
      %v420 = vmul.f32 %v410, 1.442695
      %v421 = vpow.pop %v420
      %v422 = vmul.f32 %v411, 1.442695
      %v423 = vpow.pop %v422
      %v424 = vmul.f32 %v412, 1.442695
      %v425 = vpow.pop %v424
      %v426 = vmul.f32 %v413, 1.442695
      %v427 = vpow.pop %v426
      %v428 = vmul.f32 %v414, 1.442695
      %v429 = vpow.pop %v428
      %v430 = vmul.f32 %v415, 1.442695
      %v431 = vpow.pop %v430
      %v432 = vadd.f32 %v417, 1.0
      %v433 = vadd.f32 %v419, 1.0
      %v434 = vadd.f32 %v421, 1.0
      %v435 = vadd.f32 %v423, 1.0
      %v436 = vadd.f32 %v425, 1.0
      %v437 = vadd.f32 %v427, 1.0
      %v438 = vadd.f32 %v429, 1.0
      %v439 = vadd.f32 %v431, 1.0
      %v440 = vrcp.pop %v432
      %v441 = vmul.f32 %v432, %v440
      %v442 = vsub.f32 1.0, %v441
      %v443 = vmul.f32 %v440, %v442
      %v444 = vadd.f32 %v440, %v443
      %vm445 = vweird.f32 %v432
      %vm446 = vweird.f32 %v440
      %vm447 = vmor %vm445, %vm446
      %v448 = vsel %vm447, %v440, %v444
      %v449 = vand.u32 2147483647, %v432
      %vm450 = vcmp.eq.f32.partialorder %v449, 8.507059e+37
      %v451 = vand.u32 %v432, 2147483648
      %v452 = vor.u32 1.1754944e-38, %v451
      %v453 = vsel %vm450, %v452, %v448
      %v454 = vmul.f32 1.0, %v453
      %v455 = vrcp.pop %v433
      %v456 = vmul.f32 %v433, %v455
      %v457 = vsub.f32 1.0, %v456
      %v458 = vmul.f32 %v455, %v457
      %v459 = vadd.f32 %v455, %v458
      %vm460 = vweird.f32 %v433
      %vm461 = vweird.f32 %v455
      %vm462 = vmor %vm460, %vm461
      %v463 = vsel %vm462, %v455, %v459
      %v464 = vand.u32 2147483647, %v433
      %vm465 = vcmp.eq.f32.partialorder %v464, 8.507059e+37
      %v466 = vand.u32 %v433, 2147483648
      %v467 = vor.u32 1.1754944e-38, %v466
      %v468 = vsel %vm465, %v467, %v463
      %v469 = vmul.f32 1.0, %v468
      %v470 = vrcp.pop %v434
      %v471 = vmul.f32 %v434, %v470
      %v472 = vsub.f32 1.0, %v471
      %v473 = vmul.f32 %v470, %v472
      %v474 = vadd.f32 %v470, %v473
      %vm475 = vweird.f32 %v434
      %vm476 = vweird.f32 %v470
      %vm477 = vmor %vm475, %vm476
      %v478 = vsel %vm477, %v470, %v474
      %v479 = vand.u32 2147483647, %v434
      %vm480 = vcmp.eq.f32.partialorder %v479, 8.507059e+37
      %v481 = vand.u32 %v434, 2147483648
      %v482 = vor.u32 1.1754944e-38, %v481
      %v483 = vsel %vm480, %v482, %v478
      %v484 = vmul.f32 1.0, %v483
      %v485 = vrcp.pop %v435
      %v486 = vmul.f32 %v435, %v485
      %v487 = vsub.f32 1.0, %v486
      %v488 = vmul.f32 %v485, %v487
      %v489 = vadd.f32 %v485, %v488
      %vm490 = vweird.f32 %v435
      %vm491 = vweird.f32 %v485
      %vm492 = vmor %vm490, %vm491
      %v493 = vsel %vm492, %v485, %v489
      %v494 = vand.u32 2147483647, %v435
      %vm495 = vcmp.eq.f32.partialorder %v494, 8.507059e+37
      %v496 = vand.u32 %v435, 2147483648
      %v497 = vor.u32 1.1754944e-38, %v496
      %v498 = vsel %vm495, %v497, %v493
      %v499 = vmul.f32 1.0, %v498
      %v500 = vrcp.pop %v436
      %v501 = vmul.f32 %v436, %v500
      %v502 = vsub.f32 1.0, %v501
      %v503 = vmul.f32 %v500, %v502
      %v504 = vadd.f32 %v500, %v503
      %vm505 = vweird.f32 %v436
      %vm506 = vweird.f32 %v500
      %vm507 = vmor %vm505, %vm506
      %v508 = vsel %vm507, %v500, %v504
      %v509 = vand.u32 2147483647, %v436
      %vm510 = vcmp.eq.f32.partialorder %v509, 8.507059e+37
      %v511 = vand.u32 %v436, 2147483648
      %v512 = vor.u32 1.1754944e-38, %v511
      %v513 = vsel %vm510, %v512, %v508
      %v514 = vmul.f32 1.0, %v513
      %v515 = vrcp.pop %v437
      %v516 = vmul.f32 %v437, %v515
      %v517 = vsub.f32 1.0, %v516
      %v518 = vmul.f32 %v515, %v517
      %v519 = vadd.f32 %v515, %v518
      %vm520 = vweird.f32 %v437
      %vm521 = vweird.f32 %v515
      %vm522 = vmor %vm520, %vm521
      %v523 = vsel %vm522, %v515, %v519
      %v524 = vand.u32 2147483647, %v437
      %vm525 = vcmp.eq.f32.partialorder %v524, 8.507059e+37
      %v526 = vand.u32 %v437, 2147483648
      %v527 = vor.u32 1.1754944e-38, %v526
      %v528 = vsel %vm525, %v527, %v523
      %v529 = vmul.f32 1.0, %v528
      %v530 = vrcp.pop %v438
      %v531 = vmul.f32 %v438, %v530
      %v532 = vsub.f32 1.0, %v531
      %v533 = vmul.f32 %v530, %v532
      %v534 = vadd.f32 %v530, %v533
      %vm535 = vweird.f32 %v438
      %vm536 = vweird.f32 %v530
      %vm537 = vmor %vm535, %vm536
      %v538 = vsel %vm537, %v530, %v534
      %v539 = vand.u32 2147483647, %v438
      %vm540 = vcmp.eq.f32.partialorder %v539, 8.507059e+37
      %v541 = vand.u32 %v438, 2147483648
      %v542 = vor.u32 1.1754944e-38, %v541
      %v543 = vsel %vm540, %v542, %v538
      %v544 = vmul.f32 1.0, %v543
      %v545 = vrcp.pop %v439
      %v546 = vmul.f32 %v439, %v545
      %v547 = vsub.f32 1.0, %v546
      %v548 = vmul.f32 %v545, %v547
      %v549 = vadd.f32 %v545, %v548
      %vm550 = vweird.f32 %v439
      %vm551 = vweird.f32 %v545
      %vm552 = vmor %vm550, %vm551
      %v553 = vsel %vm552, %v545, %v549
      %v554 = vand.u32 2147483647, %v439
      %vm555 = vcmp.eq.f32.partialorder %v554, 8.507059e+37
      %v556 = vand.u32 %v439, 2147483648
      %v557 = vor.u32 1.1754944e-38, %v556
      %v558 = vsel %vm555, %v557, %v553
      %v559 = vmul.f32 1.0, %v558
      %v560 = vmul.f32 %v400, %v454
      %v561 = vmul.f32 %v401, %v469
      %v562 = vmul.f32 %v402, %v484
      %v563 = vmul.f32 %v403, %v499
      %v564 = vmul.f32 %v404, %v514
      %v565 = vmul.f32 %v405, %v529
      %v566 = vmul.f32 %v406, %v544
      %v567 = vmul.f32 %v407, %v559
      %v568 = vpack.c.bf16 %v560, %v560
      %v569 = vpack.c.bf16 %v561, %v561
      %v570 = vpack.c.bf16 %v562, %v562
      %v571 = vpack.c.bf16 %v563, %v563
      %v572 = vpack.c.bf16 %v564, %v564
      %v573 = vpack.c.bf16 %v565, %v565
      %v574 = vpack.c.bf16 %v566, %v566
      %v575 = vpack.c.bf16 %v567, %v567
      %vm576 = vcmask 60416
      %577 = vst.msk [vmem:[%s197] sm:$0xf] %vm576, %v568
      %578 = vst.msk [vmem:[%s197 + $0x4] sm:$0xf] %vm576, %v569
      %579 = vst.msk [vmem:[%s197 + $0x8] sm:$0xf] %vm576, %v570
      %580 = vst.msk [vmem:[%s197 + $0xc] sm:$0xf] %vm576, %v571
      %581 = vst.msk [vmem:[%s197 + $0x10] sm:$0xf] %vm576, %v572
      %582 = vst.msk [vmem:[%s197 + $0x14] sm:$0xf] %vm576, %v573
      %583 = vst.msk [vmem:[%s197 + $0x18] sm:$0xf] %vm576, %v574
      %584 = vst.msk [vmem:[%s197 + $0x1c] sm:$0xf] %vm576, %v575
      %p585 = scmp.lt.s32.totalorder %s15, 1
      %s586 = scalar_select %p585, %s15, 1
      %s587 = smul.addr %s586, 8
      %s588 = smul.addr %s587, 4
      %s589 = scalar_lea.vmem %s4, %s588
      // Predicated region
      $region37: #{double_conv_forward.2} parent=35 // pred_check
        %p590 = pneg %p122
      $region38: #{double_conv_forward.2} parent=35 // pred_check_branch
        %592 = sbr.rel (%p590) target = $region40
      $region39: #{double_conv_forward.2} parent=35 // pred_region
        _
      $region40: #{double_conv_forward.2} parent=35 // pred_fallthru
        _
    $region36: #{double_conv_forward.2} parent=5 // pred_fallthru
      _
    %p593 = scmp.le.s32.totalorder 2, %s10
    // Predicated region
    $region41: #{double_conv_forward.2} parent=5 // pred_check
      %p594 = pneg %p593
    $region42: #{double_conv_forward.2} parent=5 // pred_check_branch
      %596 = sbr.rel (%p594) target = $region44
    $region43: #{double_conv_forward.2} parent=5 // pred_region
      %s597 = ssub.s32 %s10, 2
      // Predicated region
      $region45: #{double_conv_forward.2} parent=43 // pred_check
        %p598 = pneg %p128
      $region46: #{double_conv_forward.2} parent=43 // pred_check_branch
        %600 = sbr.rel (%p598) target = $region48
      $region47: #{double_conv_forward.2} parent=43 // pred_region
        %p601 = scmp.lt.s32.totalorder %s16, 1
        %s602 = scalar_select %p601, %s16, 1
        %s603 = smul.addr %s602, 8
        %s604 = smul.addr %s603, 4
        %s605 = scalar_lea.vmem %s4, %s604
      $region48: #{double_conv_forward.2} parent=43 // pred_fallthru
        _
    $region44: #{double_conv_forward.2} parent=5 // pred_fallthru
      _
  $region6: #{double_conv_forward.2} parent=0 // loop_footer
    %s14 = sadd.s32 1, %s10
  $region7: #{double_conv_forward.2} parent=0 // loop_footer_branch
    %9 = sbr.rel target = $region3
  $region8: #{double_conv_forward.2} parent=0 // loop_exit
    _

// kernel: double_conv_forward.3
$region0: #{double_conv_forward.3}
  #allocation0 [shape = 'u32[]', space=smem, size = 0x4, offset = 0x4, fixed_abs, tag = 'smem constant byte address 0x4 - core index']
  #allocation1 [shape = 'u32[72,128]{1,0:T(1,128)}', space=vmem, size = 0x9000, scoped, tag = 'internal scratch']
  %s0 = inlined_call_operand.vmem [shape: bf16[2,16,72], index: 0, kind: input, shape index: {}]
  %s1 = inlined_call_operand.vmem [shape: bf16[72,128], index: 1, kind: input, shape index: {}]
  %s2 = inlined_call_operand.vmem [shape: f32[1,1,128], index: 2, kind: input, shape index: {}]
  %s3 = inlined_call_operand.vmem [shape: f32[1,1,128], index: 3, kind: input, shape index: {}]
  %s4 = inlined_call_operand.vmem [shape: f32[2,16,128], index: 4, kind: output, shape index: {}]
  %s5 = sld [smem:[#allocation0]]
  $region49: #{double_conv_forward.3} parent=0
    _
  %s7 = ssub.s32 1, %s5
  %s8 = scalar_select 0, %s7, %s5
  loop: start=0, step=1, limit=4
  $region2: #{double_conv_forward.3} parent=0 // loop_pre_header
    _
  $region3: #{double_conv_forward.3} parent=0 // loop_header
    %s10 = sphi 0, %s14
    %p11 = scmp.ge.s32.totalorder %s10, 4
    %s20 = sphi 0, %s22
    %s23 = sphi 0, %s20
    %s24 = sphi 0, %s23
    %s40 = sphi 0, %s24
    %s44 = sphi 0, %s44
    %s46 = sphi 0, %s44
    %s47 = sphi 0, %s46
    %s61 = sphi 0, %s47
    %s65 = sphi 0, %s65
    %s67 = sphi 0, %s65
    %s68 = sphi 0, %s67
    %s82 = sphi 0, %s68
    %s86 = sphi 0, %s86
    %s88 = sphi 0, %s86
    %s89 = sphi 0, %s88
    %s103 = sphi 0, %s89
    %s109 = sphi 0, %s111
    %s112 = sphi 0, %s109
    %s113 = sphi 0, %s112
    %s129 = sphi 0, %s113
  $region4: #{double_conv_forward.3} parent=0 // loop_header_branch
    %13 = sbr.rel (%p11) target = $region8
  $region5: #{double_conv_forward.3} parent=0 // loop_body
    %s15 = ssub.s32 %s10, 1
    %s16 = ssub.s32 %s10, 2
    %s17 = sadd.s32 %s10, 1
    %s18 = ssub.s32 %s10, %s17
    %p19 = scmp.eq.s32.totalorder %s18, 0
    %s21 = sadd.s32 %s20, 1
    %s22 = scalar_select %p19, %s20, %s21
    %p25 = pneg %p19
    %p26 = scmp.eq.s32.totalorder %s10, 1
    %p27 = por %p25, %p26
    %p28 = scmp.ne.s32.totalorder %s20, %s23
    %p29 = scmp.eq.s32.totalorder %s10, 0
    %p30 = por %p28, %p29
    %p31 = scmp.ne.s32.totalorder %s20, %s23
    %p32 = scmp.eq.s32.totalorder %s15, 1
    %p33 = por %p31, %p32
    %p34 = scmp.ne.s32.totalorder %s23, %s24
    %p35 = scmp.eq.s32.totalorder %s15, 0
    %p36 = por %p34, %p35
    %p37 = scmp.ne.s32.totalorder %s23, %s24
    %p38 = scmp.eq.s32.totalorder %s16, 1
    %p39 = por %p37, %p38
    %p41 = scmp.ne.s32.totalorder %s24, %s40
    %p42 = scmp.eq.s32.totalorder %s16, 0
    %p43 = por %p41, %p42
    %s45 = sadd.s32 %s44, 1
    %p48 = scmp.eq.s32.totalorder %s10, 1
    %p49 = scmp.ne.s32.totalorder %s44, %s46
    %p50 = scmp.eq.s32.totalorder %s10, 0
    %p51 = por %p49, %p50
    %p52 = scmp.ne.s32.totalorder %s44, %s46
    %p53 = scmp.eq.s32.totalorder %s15, 1
    %p54 = por %p52, %p53
    %p55 = scmp.ne.s32.totalorder %s46, %s47
    %p56 = scmp.eq.s32.totalorder %s15, 0
    %p57 = por %p55, %p56
    %p58 = scmp.ne.s32.totalorder %s46, %s47
    %p59 = scmp.eq.s32.totalorder %s16, 1
    %p60 = por %p58, %p59
    %p62 = scmp.ne.s32.totalorder %s47, %s61
    %p63 = scmp.eq.s32.totalorder %s16, 0
    %p64 = por %p62, %p63
    %s66 = sadd.s32 %s65, 1
    %p69 = scmp.eq.s32.totalorder %s10, 1
    %p70 = scmp.ne.s32.totalorder %s65, %s67
    %p71 = scmp.eq.s32.totalorder %s10, 0
    %p72 = por %p70, %p71
    %p73 = scmp.ne.s32.totalorder %s65, %s67
    %p74 = scmp.eq.s32.totalorder %s15, 1
    %p75 = por %p73, %p74
    %p76 = scmp.ne.s32.totalorder %s67, %s68
    %p77 = scmp.eq.s32.totalorder %s15, 0
    %p78 = por %p76, %p77
    %p79 = scmp.ne.s32.totalorder %s67, %s68
    %p80 = scmp.eq.s32.totalorder %s16, 1
    %p81 = por %p79, %p80
    %p83 = scmp.ne.s32.totalorder %s68, %s82
    %p84 = scmp.eq.s32.totalorder %s16, 0
    %p85 = por %p83, %p84
    %s87 = sadd.s32 %s86, 1
    %p90 = scmp.eq.s32.totalorder %s10, 1
    %p91 = scmp.ne.s32.totalorder %s86, %s88
    %p92 = scmp.eq.s32.totalorder %s10, 0
    %p93 = por %p91, %p92
    %p94 = scmp.ne.s32.totalorder %s86, %s88
    %p95 = scmp.eq.s32.totalorder %s15, 1
    %p96 = por %p94, %p95
    %p97 = scmp.ne.s32.totalorder %s88, %s89
    %p98 = scmp.eq.s32.totalorder %s15, 0
    %p99 = por %p97, %p98
    %p100 = scmp.ne.s32.totalorder %s88, %s89
    %p101 = scmp.eq.s32.totalorder %s16, 1
    %p102 = por %p100, %p101
    %p104 = scmp.ne.s32.totalorder %s89, %s103
    %p105 = scmp.eq.s32.totalorder %s16, 0
    %p106 = por %p104, %p105
    %s107 = ssub.s32 %s10, %s17
    %p108 = scmp.eq.s32.totalorder %s107, 0
    %s110 = sadd.s32 %s109, 1
    %s111 = scalar_select %p108, %s109, %s110
    %p114 = pneg %p108
    %p115 = scmp.eq.s32.totalorder %s10, 1
    %p116 = por %p114, %p115
    %p117 = scmp.ne.s32.totalorder %s109, %s112
    %p118 = scmp.eq.s32.totalorder %s10, 0
    %p119 = por %p117, %p118
    %p120 = scmp.ne.s32.totalorder %s109, %s112
    %p121 = scmp.eq.s32.totalorder %s15, 1
    %p122 = por %p120, %p121
    %p123 = scmp.ne.s32.totalorder %s112, %s113
    %p124 = scmp.eq.s32.totalorder %s15, 0
    %p125 = por %p123, %p124
    %p126 = scmp.ne.s32.totalorder %s112, %s113
    %p127 = scmp.eq.s32.totalorder %s16, 1
    %p128 = por %p126, %p127
    %p130 = scmp.ne.s32.totalorder %s113, %s129
    %p131 = scmp.eq.s32.totalorder %s16, 0
    %p132 = por %p130, %p131
    %p133 = scmp.le.s32.totalorder 1, %s10
    %p134 = scmp.lt.s32.totalorder %s10, 3
    %p135 = pnand %p133, %p134
    %p136 = pneg %p135
    // Predicated region
    $region9: #{double_conv_forward.3} parent=5 // pred_check
      _
    $region10: #{double_conv_forward.3} parent=5 // pred_check_branch
      %138 = sbr.rel (%p135) target = $region12
    $region11: #{double_conv_forward.3} parent=5 // pred_region
      %s139 = ssub.s32 %s10, 1
      // Predicated region
      $region13: #{double_conv_forward.3} parent=11 // pred_check
        %p140 = pneg %p57
      $region14: #{double_conv_forward.3} parent=11 // pred_check_branch
        %142 = sbr.rel (%p140) target = $region16
      $region15: #{double_conv_forward.3} parent=11 // pred_region
        _
      $region16: #{double_conv_forward.3} parent=11 // pred_fallthru
        _
      // Predicated region
      $region17: #{double_conv_forward.3} parent=11 // pred_check
        %p143 = pneg %p78
      $region18: #{double_conv_forward.3} parent=11 // pred_check_branch
        %145 = sbr.rel (%p143) target = $region20
      $region19: #{double_conv_forward.3} parent=11 // pred_region
        _
      $region20: #{double_conv_forward.3} parent=11 // pred_fallthru
        _
      // Predicated region
      $region21: #{double_conv_forward.3} parent=11 // pred_check
        %p146 = pneg %p99
      $region22: #{double_conv_forward.3} parent=11 // pred_check_branch
        %148 = sbr.rel (%p146) target = $region24
      $region23: #{double_conv_forward.3} parent=11 // pred_region
        _
      $region24: #{double_conv_forward.3} parent=11 // pred_fallthru
        _
    $region12: #{double_conv_forward.3} parent=5 // pred_fallthru
      _
    %p149 = scmp.lt.s32.totalorder %s10, 2
    // Predicated region
    $region25: #{double_conv_forward.3} parent=5 // pred_check
      %p150 = pneg %p149
    $region26: #{double_conv_forward.3} parent=5 // pred_check_branch
      %152 = sbr.rel (%p150) target = $region28
    $region27: #{double_conv_forward.3} parent=5 // pred_region
      // Predicated region
      $region29: #{double_conv_forward.3} parent=27 // pred_check
        %p153 = pneg %p30
      $region30: #{double_conv_forward.3} parent=27 // pred_check_branch
        %155 = sbr.rel (%p153) target = $region32
      $region31: #{double_conv_forward.3} parent=27 // pred_region
        %p156 = scmp.lt.s32.totalorder %s10, 1
        %s157 = scalar_select %p156, %s10, 1
        %s158 = smul.addr %s157, 2
        %s159 = smul.addr %s158, 4
        %s160 = scalar_lea.vmem %s0, %s159
      $region32: #{double_conv_forward.3} parent=27 // pred_fallthru
        _
    $region28: #{double_conv_forward.3} parent=5 // pred_fallthru
      _
    %p161 = scmp.le.s32.totalorder 1, %s10
    %p162 = scmp.lt.s32.totalorder %s10, 3
    %p163 = pnand %p161, %p162
    %p164 = pneg %p163
    // Predicated region
    $region33: #{double_conv_forward.3} parent=5 // pred_check
      _
    $region34: #{double_conv_forward.3} parent=5 // pred_check_branch
      %166 = sbr.rel (%p163) target = $region36
    $region35: #{double_conv_forward.3} parent=5 // pred_region
      %s167 = ssub.s32 %s10, 1
      %p168 = scmp.lt.s32.totalorder %s15, 1
      %s169 = scalar_select %p168, %s15, 1
      %s170 = smul.addr %s169, 2
      %s171 = smul.addr %s170, 4
      %s172 = scalar_lea.vmem %s0, %s171
      %p173 = pneg %p36
      %p174 = pneg %p33
      %p175 = pneg %p57
      %p176 = pneg %p54
      %p177 = pneg %p78
      %p178 = pneg %p75
      %p179 = pneg %p99
      %p180 = pneg %p96
      %p181 = pneg %p125
      %p182 = pneg %p122
      %p183 = scmp.lt.s32.totalorder %s15, 1
      %s184 = scalar_select %p183, %s15, 1
      %s185 = smul.addr %s184, 2
      %s186 = smul.addr %s185, 8
      %s187 = scalar_lea.vmem %s4, %s186
      %p188 = scmp.lt.s32.totalorder %s15, 1
      %s189 = scalar_select %p188, %s15, 1
      %s190 = smul.addr %s189, 2
      %s191 = smul.addr %s190, 4
      %s192 = scalar_lea.vmem %s0, %s191
      %p193 = scmp.lt.s32.totalorder %s15, 1
      %s194 = scalar_select %p193, %s15, 1
      %s195 = smul.addr %s194, 2
      %s196 = smul.addr %s195, 8
      %s197 = scalar_lea.vmem %s4, %s196
      %v199 = vld [vmem:[%s192] sm:$0xf]
      %v200 = vld [vmem:[%s192 + $0x4] sm:$0xf]
      %v201 = vld [vmem:[%s1] sm:$0xf]
      %v202 = vld [vmem:[%s1 + $0x4] sm:$0xf]
      %v203 = vld [vmem:[%s1 + $0x8] sm:$0xf]
      %v204 = vld [vmem:[%s1 + $0xc] sm:$0xf]
      %v205 = vld [vmem:[%s1 + $0x10] sm:$0xf]
      %v206 = vld [vmem:[%s1 + $0x14] sm:$0xf]
      %v207 = vld [vmem:[%s1 + $0x18] sm:$0xf]
      %v208 = vld [vmem:[%s1 + $0x1c] sm:$0xf]
      %v209 = vld [vmem:[%s1 + $0x20] sm:$0xf]
      %v212 = vunpack.c.l.b16 %v199
      %v213 = vunpack.c.l.b16 %v200
      %v214 = vpack.c.b16 %v213, %v212
      %v224 = vunpack.c.l.b16 %v201
      %v225 = vunpack.c.l.b16 %v202
      %v226 = vunpack.c.l.b16 %v203
      %v227 = vunpack.c.l.b16 %v204
      %v228 = vunpack.c.l.b16 %v205
      %v229 = vunpack.c.l.b16 %v206
      %v230 = vunpack.c.l.b16 %v207
      %v231 = vunpack.c.l.b16 %v208
      %v232 = vunpack.c.l.b16 %v209
      %v233 = vpack.c.b16 %v225, %v224
      %v234 = vpack.c.b16 %v227, %v226
      %v235 = vpack.c.b16 %v229, %v228
      %v236 = vpack.c.b16 %v231, %v230
      %v237 = vpack.c.b16 %v232, %v232
      %vm242 = vcmask 588800
      %v244 = vsel %vm242, %v214, 0
      %vm246 = vcmask 1043456
      %v248 = vsel %vm246, %v237, 0
      %250 = vmatpush.bf16.msra.mxu0 0
      %251 = vmatpush.bf16.msra.mxu0 0
      %252 = vmatpush.bf16.msra.mxu0 0
      %253 = vmatpush.bf16.msra.mxu0 %v248
      %254 = vmatpush.bf16.msra.mxu0 %v236
      %255 = vmatpush.bf16.msra.mxu0 %v235
      %256 = vmatpush.bf16.msra.mxu0 %v234
      %257 = vmatpush.bf16.msra.mxu0 %v233
      %258 = vmatmul.bf16.gmra.mxu0 %v244
      %v259 = vpop.f32.mrf.mxu0
      %v260 = vadd.f32 0.0, %v259
      %v261 = vpop.f32.mrf.mxu0
      %v262 = vadd.f32 0.0, %v261
      %263 = vdwg.mxu0
      %v264 = vadd.f32 %v260, %v262
      %265 = vadd.xlane.f32.xlu0 %v264
      %v266 = vpop.xlane.xlu0 %265
      %v267 = vrot.slane %v266, 4
      %v268 = vadd.f32 %v266, %v267
      %v269 = vrot.slane %v268, 2
      %v270 = vadd.f32 %v268, %v269
      %v271 = vrot.slane %v270, 1
      %v272 = vadd.f32 %v270, %v271
      %v273 = vrcp.pop 128.0
      %v274 = vmul.f32 128.0, %v273
      %v275 = vsub.f32 1.0, %v274
      %v276 = vmul.f32 %v273, %v275
      %v277 = vadd.f32 %v273, %v276
      %vm278 = vweird.f32 %v273
      %v279 = vsel %vm278, %v273, %v277
      %v280 = vmul.f32 %v272, %v279
      %v281 = vsub.f32 %v260, %v280
      %v282 = vsub.f32 %v262, %v280
      %v283 = vlaneseq
      %v284 = vand.u32 %v283, 127
      %vm285 = vcmp.lt.s32.totalorder %v284, 8
      %v286 = vsel %vm285, 1, 0
      %vm287 = vcmp.eq.s32.totalorder %v286, 1
      %v288 = vsel %vm287, %v281, 0.0
      %v289 = vsel %vm287, %v282, 0.0
      %v290 = vmul.f32 %v288, %v288
      %v291 = vmul.f32 %v289, %v289
      %v292 = vadd.f32 %v290, %v291
      %293 = vadd.xlane.f32.xlu0 %v292
      %v294 = vpop.xlane.xlu0 %293
      %v295 = vrot.slane %v294, 4
      %v296 = vadd.f32 %v294, %v295
      %v297 = vrot.slane %v296, 2
      %v298 = vadd.f32 %v296, %v297
      %v299 = vrot.slane %v298, 1
      %v300 = vadd.f32 %v298, %v299
      %v301 = vmul.f32 %v300, %v279
      %v302 = vadd.f32 %v301, 1e-05
      %v303 = vrsqrt.pop %v302
      %v304 = vmul.f32 %v303, %v302
      %v305 = vmul.f32 %v304, %v303
      %v306 = vmul.f32 0.5, %v305
      %v307 = vsub.f32 1.5, %v306
      %v308 = vmul.f32 %v303, %v307
      %vm309 = vweird.f32 %v302
      %vm310 = vweird.f32 %v303
      %vm311 = vmor %vm309, %vm310
      %v312 = vsel %vm311, %v303, %v308
      %v313 = vmul.f32 %v288, %v312
      %v314 = vmul.f32 %v289, %v312
      %v315 = vld [vmem:[%s2] sm:$0x1]
      %v317 = vperm.slane %v315, 0
      %v319 = vmul.f32 %v313, %v317
      %v320 = vmul.f32 %v314, %v317
      %v321 = vld [vmem:[%s3] sm:$0x1]
      %v323 = vperm.slane %v321, 0
      %v325 = vadd.f32 %v319, %v323
      %v326 = vadd.f32 %v320, %v323
      %327 = vst [vmem:[%s197] sm:$0xff] %v325
      %328 = vst [vmem:[%s197 + $0x8] sm:$0xff] %v326
      %p329 = scmp.lt.s32.totalorder %s15, 1
      %s330 = scalar_select %p329, %s15, 1
      %s331 = smul.addr %s330, 2
      %s332 = smul.addr %s331, 8
      %s333 = scalar_lea.vmem %s4, %s332
      // Predicated region
      $region37: #{double_conv_forward.3} parent=35 // pred_check
        %p334 = pneg %p122
      $region38: #{double_conv_forward.3} parent=35 // pred_check_branch
        %336 = sbr.rel (%p334) target = $region40
      $region39: #{double_conv_forward.3} parent=35 // pred_region
        _
      $region40: #{double_conv_forward.3} parent=35 // pred_fallthru
        _
    $region36: #{double_conv_forward.3} parent=5 // pred_fallthru
      _
    %p337 = scmp.le.s32.totalorder 2, %s10
    // Predicated region
    $region41: #{double_conv_forward.3} parent=5 // pred_check
      %p338 = pneg %p337
    $region42: #{double_conv_forward.3} parent=5 // pred_check_branch
      %340 = sbr.rel (%p338) target = $region44
    $region43: #{double_conv_forward.3} parent=5 // pred_region
      %s341 = ssub.s32 %s10, 2
      // Predicated region
      $region45: #{double_conv_forward.3} parent=43 // pred_check
        %p342 = pneg %p128
      $region46: #{double_conv_forward.3} parent=43 // pred_check_branch
        %344 = sbr.rel (%p342) target = $region48
      $region47: #{double_conv_forward.3} parent=43 // pred_region
        %p345 = scmp.lt.s32.totalorder %s16, 1
        %s346 = scalar_select %p345, %s16, 1
        %s347 = smul.addr %s346, 2
        %s348 = smul.addr %s347, 8
        %s349 = scalar_lea.vmem %s4, %s348
      $region48: #{double_conv_forward.3} parent=43 // pred_fallthru
        _
    $region44: #{double_conv_forward.3} parent=5 // pred_fallthru
      _
  $region6: #{double_conv_forward.3} parent=0 // loop_footer
    %s14 = sadd.s32 1, %s10
  $region7: #{double_conv_forward.3} parent=0 // loop_footer_branch
    %9 = sbr.rel target = $region3
  $region8: #{double_conv_forward.3} parent=0 // loop_exit
    _

</llo_original>
